<compile_context>
chip_gen: v7x
topology: tpu7x:2x2x1
jax: 0.10.0
libtpu: 0.0.40
codegen_flags: <defaults>
</compile_context>

<pallas_src>
import functools

import jax
import jax.numpy as jnp
from jax.experimental import pallas as pl
from jax.experimental.pallas import tpu as pltpu

LANE = 128


def _fused_graphsage_kernel(a_ref, x_ref, ws_ref, wn_ref, b_ref, o_ref,
                            h1_ref, *, tm, deg_col):
    """Fused 2-layer GraphSAGE.  Grid: (layer, dst_tile) — both sequential.

    a_ref:  (tm, Np)     bf16 adjacency rows for this dst tile (dst x src)
    x_ref:  (Np, F)      bf16 padded input features (resident, constant block);
                         column `deg_col` is all-ones (free-degree trick).
    ws_ref: (1, F, F)    bf16 self-weight of the current layer
    wn_ref: (1, F, F)    bf16 neighbor-weight of the current layer
    b_ref:  (1, 1, F)    f32 bias of the current layer (layer-0 bias carries a
                         1.0 in column `deg_col` so relu'd h1 keeps the ones
                         column for the layer-1 pass).
    o_ref:  (tm, F)      f32 output tile; written only on the layer-1 pass.
    h1_ref: (Np, F)      bf16 VMEM scratch holding the full layer-1 activation.
    """
    layer = pl.program_id(0)
    tile = pl.program_id(1)
    row0 = pl.multiple_of(tile * tm, tm)

    a = a_ref[...]                       # (tm, Np) bf16 — 0/1 exact, no upcast
    ws = ws_ref[0]                       # (F, F) bf16
    wn = wn_ref[0]                       # (F, F) bf16
    b = b_ref[0]                         # (1, F)  f32

    def conv(z_ref, apply_relu):
        z_full = z_ref[...]                                   # (Np, F) bf16
        z_dst = z_ref[pl.ds(row0, tm), :]                     # (tm, F) bf16
        # bf16 x bf16 MXU matmul, f32 accumulation.  Column `deg_col` of z is
        # all-ones, so this product already contains the in-degree (exact in
        # f32) — no XLU lane-reduce needed.
        neigh_raw = jnp.dot(a, z_full,
                            preferred_element_type=jnp.float32)  # (tm, F) f32
        deg = neigh_raw[:, deg_col:deg_col + 1]                  # (tm, 1)
        inv_deg = 1.0 / jnp.maximum(deg, 1.0)
        neigh = (neigh_raw * inv_deg).astype(jnp.bfloat16)
        out = (jnp.dot(z_dst, ws, preferred_element_type=jnp.float32)
               + jnp.dot(neigh, wn, preferred_element_type=jnp.float32)
               + b)
        if apply_relu:
            out = jnp.maximum(out, 0.0)
        return out

    @pl.when(layer == 0)
    def _():
        # Stash the layer-1 activation in VMEM.  o_ref is deliberately NOT
        # written here: the output block is flushed to HBM exactly once, on
        # the layer-1 pass (out_specs collapses layer-0 steps onto block 0).
        h1_ref[pl.ds(row0, tm), :] = conv(x_ref, True).astype(h1_ref.dtype)

    @pl.when(layer == 1)
    def _():
        o_ref[...] = conv(h1_ref, False).astype(o_ref.dtype)


def _round_up(v, m):
    return pl.cdiv(v, m) * m


def _pad2(a, rows, cols):
    return jnp.pad(a, ((0, rows - a.shape[0]), (0, cols - a.shape[1])))


def _pick_tile(n, cap=256):
    """Dst-tile size: a multiple of 16 dividing round_up(n, 16) (16 always
    does), preferring the largest <= cap so MXU rows stay full."""
    n16 = _round_up(n, 16)
    if n16 <= cap:
        return n16
    best = 16
    for tm in range(16, cap + 1, 16):
        if n16 % tm == 0:
            best = tm
    return best


def graphsage_forward(adj, x, params, *, tm=None):
    """GraphSAGE.forward: h = relu(conv1(g, x)); out = conv2(g, h)."""
    n, in_feats = x.shape
    h_feats = params["w_self1"].shape[1]

    # Lane-pad the feature dim; reserve at least one genuinely unused padded
    # column for the free-degree trick.
    f_pad = _round_up(max(in_feats, h_feats) + 1, LANE)
    deg_col = f_pad - 1
    assert deg_col >= max(in_feats, h_feats), "need a free padded lane column"

    if tm is None:
        tm = _pick_tile(n)
    assert tm % 8 == 0, "dst tile must be a multiple of the sublane width"
    # Zero-pad N to a multiple of the tile: padded rows/cols of A are zero, so
    # they cannot influence real rows; padded output rows are sliced off.
    n_pad = _round_up(n, tm)
    n_tiles = n_pad // tm

    # bf16 adjacency (0/1 exact) -> bf16 MXU path + half the O(N^2) HBM bytes.
    adj_p = _pad2(adj, n_pad, n_pad).astype(jnp.bfloat16)

    # bf16 features, lane-padded; degree column = 1.0 so A @ x carries deg.
    x_p = _pad2(x, n_pad, f_pad).at[:, deg_col].set(1.0).astype(jnp.bfloat16)

    # bf16 weights (zero rows/cols in the padding, so padded columns contribute
    # nothing); f32 bias.  Layer-0 bias carries 1.0 in the degree column so the
    # relu'd h1 activation keeps the ones column for the layer-1 pass.
    w_self = jnp.stack([_pad2(params["w_self1"], f_pad, f_pad),
                        _pad2(params["w_self2"], f_pad, f_pad)]
                       ).astype(jnp.bfloat16)                      # (2, F, F)
    w_neigh = jnp.stack([_pad2(params["w_neigh1"], f_pad, f_pad),
                         _pad2(params["w_neigh2"], f_pad, f_pad)]
                        ).astype(jnp.bfloat16)                     # (2, F, F)
    b1 = _pad2(params["b1"], 1, f_pad).at[0, deg_col].set(1.0)
    b2 = _pad2(params["b2"], 1, f_pad)
    bias = jnp.stack([b1, b2]).astype(jnp.float32)                 # (2, 1, F)

    # VMEM budget (bytes): A double-buffer + resident x + h1 scratch + weight /
    # bias / output double-buffers, with 2x headroom, capped at 64 MiB.
    est = (2 * tm * n_pad * 2            # adjacency block, double-buffered bf16
           + 2 * n_pad * f_pad * 2       # x (conservatively double-buffered)
           + n_pad * f_pad * 2           # h1 scratch
           + 2 * 2 * f_pad * f_pad * 2   # two weight stacks, double-buffered
           + 2 * f_pad * 4               # bias
           + 2 * tm * f_pad * 4)         # output tile, double-buffered
    vmem_limit = int(min(max(2 * est, 32 * 1024 * 1024), 64 * 1024 * 1024))

    kernel = functools.partial(_fused_graphsage_kernel, tm=tm, deg_col=deg_col)

    out_pad = pl.pallas_call(
        kernel,
        out_shape=jax.ShapeDtypeStruct((n_pad, f_pad), jnp.float32),
        grid_spec=pltpu.PrefetchScalarGridSpec(
            num_scalar_prefetch=0,
            grid=(2, n_tiles),                       # (layer, dst tile)
            in_specs=[
                # adjacency rows for this dst tile (refetched per layer pass;
                # constant block index when n_tiles == 1).
                pl.BlockSpec((tm, n_pad), lambda l, i: (i, 0)),
                # full input features, resident for the whole grid.
                pl.BlockSpec((n_pad, f_pad), lambda l, i: (0, 0)),
                # per-layer weights / bias, swapped only at the layer boundary.
                pl.BlockSpec((1, f_pad, f_pad), lambda l, i: (l, 0, 0)),
                pl.BlockSpec((1, f_pad, f_pad), lambda l, i: (l, 0, 0)),
                pl.BlockSpec((1, 1, f_pad), lambda l, i: (l, 0, 0)),
            ],
            # Collapse all layer-0 steps onto output block 0 so each output
            # tile is written back to HBM exactly once, on its layer-1 step
            # (block revisits stay consecutive in grid order).
            out_specs=pl.BlockSpec((tm, f_pad), lambda l, i: (l * i, 0)),
            scratch_shapes=[pltpu.VMEM((n_pad, f_pad), jnp.bfloat16)],  # h1
        ),
        compiler_params=pltpu.CompilerParams(
            # Both axes sequential: layer 1 reads every layer-0 tile through
            # the VMEM scratch, so the tile axis cannot be megacore-parallel
            # in this fused form.
            dimension_semantics=("arbitrary", "arbitrary"),
            vmem_limit_bytes=vmem_limit),
    )(adj_p, x_p, w_self, w_neigh, bias)

    return out_pad[:n, :h_feats]


def graphsage_reference(adj, x, params):
    """Pure-JAX f32 reference for the correctness check."""
    in_deg = jnp.sum(adj, axis=1, keepdims=True)
    inv_deg = 1.0 / jnp.maximum(in_deg, 1.0)

    def conv(h, ws, wn, b):
        neigh = (adj @ h) * inv_deg
        return h @ ws + neigh @ wn + b

    h = jax.nn.relu(conv(x, params["w_self1"], params["w_neigh1"], params["b1"]))
    return conv(h, params["w_self2"], params["w_neigh2"], params["b2"])


def init_params(key, in_feats, h_feats):
    ks = jax.random.split(key, 6)
    scale1 = 1.0 / jnp.sqrt(in_feats)
    scale2 = 1.0 / jnp.sqrt(h_feats)
    return {
        # weights stored pre-transposed as (F_in, F_out)
        "w_self1": jax.random.uniform(ks[0], (in_feats, h_feats), jnp.float32,
                                      -scale1, scale1),
        "w_neigh1": jax.random.uniform(ks[1], (in_feats, h_feats), jnp.float32,
                                       -scale1, scale1),
        "b1": jax.random.uniform(ks[2], (1, h_feats), jnp.float32, -scale1, scale1),
        "w_self2": jax.random.uniform(ks[3], (h_feats, h_feats), jnp.float32,
                                      -scale2, scale2),
        "w_neigh2": jax.random.uniform(ks[4], (h_feats, h_feats), jnp.float32,
                                       -scale2, scale2),
        "b2": jax.random.uniform(ks[5], (1, h_feats), jnp.float32, -scale2, scale2),
    }


if __name__ == "__main__":
    N = 128         # number of graph nodes (small; exercises the tiled path)
    IN_FEATS = 32
    H_FEATS = 32

    key = jax.random.PRNGKey(0)
    k_adj, k_feat, k_param = jax.random.split(key, 3)

    # Deterministic random graph as dense adjacency (with self-loops).
    adj = (jax.random.uniform(k_adj, (N, N)) < 0.15).astype(jnp.float32)
    adj = jnp.maximum(adj, jnp.eye(N, dtype=jnp.float32))

    x = jax.random.normal(k_feat, (N, IN_FEATS), dtype=jnp.float32)
    params = init_params(k_param, IN_FEATS, H_FEATS)

    # tm=64 -> 2 dst tiles, exercising both layer phases and the tiling.
    out = graphsage_forward(adj, x, params, tm=64)
    out = jax.block_until_ready(out)

    ref = graphsage_reference(adj, x, params)
    assert out.shape == (N, H_FEATS)
    # bf16 operand path (f32 accumulation): feature/weight rounding bounds
    # accuracy, so the tolerance is looser than the pure-f32 version.
    assert jnp.allclose(out, ref, atol=3e-2, rtol=3e-2), "mismatch vs reference"

    print("KERNEL_OK")
</pallas_src>

<mosaic_0001>
module attributes {stable_mosaic.version = 11 : i64} {
  func.func @_fused_graphsage_kernel(%arg0: i32, %arg1: i32, %arg2: memref<64x128xbf16, #tpu.memory_space<vmem>>, %arg3: memref<128x128xbf16, #tpu.memory_space<vmem>>, %arg4: memref<1x128x128xbf16, #tpu.memory_space<vmem>>, %arg5: memref<1x128x128xbf16, #tpu.memory_space<vmem>>, %arg6: memref<1x1x128xf32, #tpu.memory_space<vmem>>, %arg7: memref<64x128xf32, #tpu.memory_space<vmem>>, %arg8: memref<128x128xbf16, #tpu.memory_space<vmem>>) attributes {dimension_semantics = [#tpu.dimension_semantics<arbitrary>, #tpu.dimension_semantics<arbitrary>], iteration_bounds = array<i64: 2, 2>, scalar_prefetch = 0 : i64, scratch_operands = 1 : i64, tpu.core_type = #tpu.core_type<tc>, window_params = [{transform_indices = @transform_0, window_bounds = array<i64: 64, 128>}, {pipeline_mode = #tpu.pipeline_mode<synchronous>, transform_indices = @transform_1, window_bounds = array<i64: 128, 128>}, {transform_indices = @transform_2, window_bounds = array<i64: 1, 128, 128>}, {transform_indices = @transform_3, window_bounds = array<i64: 1, 128, 128>}, {transform_indices = @transform_4, window_bounds = array<i64: 1, 1, 128>}, {transform_indices = @transform_5, window_bounds = array<i64: 64, 128>}]} {
    %c64_i32 = arith.constant 64 : i32
    %0 = arith.muli %arg1, %c64_i32 : i32
    %1 = tpu.assume_multiple %0, 64 : i32
    %c0 = arith.constant 0 : index
    %c0_0 = arith.constant 0 : index
    %2 = vector.load %arg2[%c0, %c0_0] : memref<64x128xbf16, #tpu.memory_space<vmem>>, vector<64x128xbf16>
    %c0_1 = arith.constant 0 : index
    %c0_2 = arith.constant 0 : index
    %c0_3 = arith.constant 0 : index
    %3 = vector.load %arg4[%c0_1, %c0_2, %c0_3] : memref<1x128x128xbf16, #tpu.memory_space<vmem>>, vector<1x128x128xbf16>
    %4 = vector.shape_cast %3 : vector<1x128x128xbf16> to vector<128x128xbf16>
    %c0_4 = arith.constant 0 : index
    %c0_5 = arith.constant 0 : index
    %c0_6 = arith.constant 0 : index
    %5 = vector.load %arg5[%c0_4, %c0_5, %c0_6] : memref<1x128x128xbf16, #tpu.memory_space<vmem>>, vector<1x128x128xbf16>
    %6 = vector.shape_cast %5 : vector<1x128x128xbf16> to vector<128x128xbf16>
    %c0_7 = arith.constant 0 : index
    %c0_8 = arith.constant 0 : index
    %c0_9 = arith.constant 0 : index
    %7 = vector.load %arg6[%c0_7, %c0_8, %c0_9] : memref<1x1x128xf32, #tpu.memory_space<vmem>>, vector<1x1x128xf32>
    %8 = vector.shape_cast %7 : vector<1x1x128xf32> to vector<1x128xf32>
    %c0_i32 = arith.constant 0 : i32
    %9 = arith.cmpi eq, %arg0, %c0_i32 : i32
    %10 = arith.extui %9 : i1 to i32
    %c0_i32_10 = arith.constant 0 : i32
    %11 = arith.cmpi ne, %10, %c0_i32_10 : i32
    scf.if %11 {
      %c0_12 = arith.constant 0 : index
      %c0_13 = arith.constant 0 : index
      %15 = vector.load %arg3[%c0_12, %c0_13] : memref<128x128xbf16, #tpu.memory_space<vmem>>, vector<128x128xbf16>
      %16 = arith.index_cast %1 : i32 to index
      %c0_14 = arith.constant 0 : index
      %17 = vector.load %arg3[%16, %c0_14] : memref<128x128xbf16, #tpu.memory_space<vmem>>, vector<64x128xbf16>
      %cst = arith.constant dense<0.000000e+00> : vector<64x128xf32>
      %18 = tpu.matmul %2, %15, %cst {dimension_numbers = #tpu.dot_dimension_numbers<[1], [0], [0], [1], [0, 0, 1, 1], [], []>} : vector<64x128xbf16>, vector<128x128xbf16>, vector<64x128xf32> -> vector<64x128xf32>
      %19 = vector.extract_strided_slice %18 {offsets = [0, 127], sizes = [64, 1], strides = [1, 1]} : vector<64x128xf32> to vector<64x1xf32>
      %cst_15 = arith.constant 1.000000e+00 : f32
      %20 = vector.broadcast %cst_15 : f32 to vector<64x1xf32>
      %21 = arith.maximumf %19, %20 : vector<64x1xf32>
      %cst_16 = arith.constant 1.000000e+00 : f32
      %22 = vector.broadcast %cst_16 : f32 to vector<64x1xf32>
      %23 = arith.divf %22, %21 : vector<64x1xf32>
      %24 = vector.broadcast %23 : vector<64x1xf32> to vector<64x128xf32>
      %25 = arith.mulf %18, %24 : vector<64x128xf32>
      %26 = arith.truncf %25 : vector<64x128xf32> to vector<64x128xbf16>
      %cst_17 = arith.constant dense<0.000000e+00> : vector<64x128xf32>
      %27 = tpu.matmul %17, %4, %cst_17 {dimension_numbers = #tpu.dot_dimension_numbers<[1], [0], [0], [1], [0, 0, 1, 1], [], []>} : vector<64x128xbf16>, vector<128x128xbf16>, vector<64x128xf32> -> vector<64x128xf32>
      %cst_18 = arith.constant dense<0.000000e+00> : vector<64x128xf32>
      %28 = tpu.matmul %26, %6, %cst_18 {dimension_numbers = #tpu.dot_dimension_numbers<[1], [0], [0], [1], [0, 0, 1, 1], [], []>} : vector<64x128xbf16>, vector<128x128xbf16>, vector<64x128xf32> -> vector<64x128xf32>
      %29 = arith.addf %27, %28 : vector<64x128xf32>
      %30 = vector.broadcast %8 : vector<1x128xf32> to vector<64x128xf32>
      %31 = arith.addf %29, %30 : vector<64x128xf32>
      %cst_19 = arith.constant 0.000000e+00 : f32
      %32 = vector.broadcast %cst_19 : f32 to vector<64x128xf32>
      %33 = arith.maximumf %31, %32 : vector<64x128xf32>
      %34 = arith.truncf %33 : vector<64x128xf32> to vector<64x128xbf16>
      %35 = arith.index_cast %1 : i32 to index
      %c0_20 = arith.constant 0 : index
      %36 = vector.load %arg8[%35, %c0_20] : memref<128x128xbf16, #tpu.memory_space<vmem>>, vector<64x128xbf16>
      tpu.vector_store %arg8[%35, %c0_20], %34 {strides = array<i32>} : memref<128x128xbf16, #tpu.memory_space<vmem>>, vector<64x128xbf16>,
    } else {
    }
    %c1_i32 = arith.constant 1 : i32
    %12 = arith.cmpi eq, %arg0, %c1_i32 : i32
    %13 = arith.extui %12 : i1 to i32
    %c0_i32_11 = arith.constant 0 : i32
    %14 = arith.cmpi ne, %13, %c0_i32_11 : i32
    scf.if %14 {
      %c0_12 = arith.constant 0 : index
      %c0_13 = arith.constant 0 : index
      %15 = vector.load %arg8[%c0_12, %c0_13] : memref<128x128xbf16, #tpu.memory_space<vmem>>, vector<128x128xbf16>
      %16 = arith.index_cast %1 : i32 to index
      %c0_14 = arith.constant 0 : index
      %17 = vector.load %arg8[%16, %c0_14] : memref<128x128xbf16, #tpu.memory_space<vmem>>, vector<64x128xbf16>
      %cst = arith.constant dense<0.000000e+00> : vector<64x128xf32>
      %18 = tpu.matmul %2, %15, %cst {dimension_numbers = #tpu.dot_dimension_numbers<[1], [0], [0], [1], [0, 0, 1, 1], [], []>} : vector<64x128xbf16>, vector<128x128xbf16>, vector<64x128xf32> -> vector<64x128xf32>
      %19 = vector.extract_strided_slice %18 {offsets = [0, 127], sizes = [64, 1], strides = [1, 1]} : vector<64x128xf32> to vector<64x1xf32>
      %cst_15 = arith.constant 1.000000e+00 : f32
      %20 = vector.broadcast %cst_15 : f32 to vector<64x1xf32>
      %21 = arith.maximumf %19, %20 : vector<64x1xf32>
      %cst_16 = arith.constant 1.000000e+00 : f32
      %22 = vector.broadcast %cst_16 : f32 to vector<64x1xf32>
      %23 = arith.divf %22, %21 : vector<64x1xf32>
      %24 = vector.broadcast %23 : vector<64x1xf32> to vector<64x128xf32>
      %25 = arith.mulf %18, %24 : vector<64x128xf32>
      %26 = arith.truncf %25 : vector<64x128xf32> to vector<64x128xbf16>
      %cst_17 = arith.constant dense<0.000000e+00> : vector<64x128xf32>
      %27 = tpu.matmul %17, %4, %cst_17 {dimension_numbers = #tpu.dot_dimension_numbers<[1], [0], [0], [1], [0, 0, 1, 1], [], []>} : vector<64x128xbf16>, vector<128x128xbf16>, vector<64x128xf32> -> vector<64x128xf32>
      %cst_18 = arith.constant dense<0.000000e+00> : vector<64x128xf32>
      %28 = tpu.matmul %26, %6, %cst_18 {dimension_numbers = #tpu.dot_dimension_numbers<[1], [0], [0], [1], [0, 0, 1, 1], [], []>} : vector<64x128xbf16>, vector<128x128xbf16>, vector<64x128xf32> -> vector<64x128xf32>
      %29 = arith.addf %27, %28 : vector<64x128xf32>
      %30 = vector.broadcast %8 : vector<1x128xf32> to vector<64x128xf32>
      %31 = arith.addf %29, %30 : vector<64x128xf32>
      %c0_19 = arith.constant 0 : index
      %c0_20 = arith.constant 0 : index
      %32 = vector.load %arg7[%c0_19, %c0_20] : memref<64x128xf32, #tpu.memory_space<vmem>>, vector<64x128xf32>
      tpu.vector_store %arg7[%c0_19, %c0_20], %31 {strides = array<i32>} : memref<64x128xf32, #tpu.memory_space<vmem>>, vector<64x128xf32>,
    } else {
    }
    return
  }
  func.func @transform_0(%arg0: i32, %arg1: i32) -> (i32, i32) {
    %c0_i32 = arith.constant 0 : i32
    %c0_i32_0 = arith.constant 0 : i32
    return %arg1, %c0_i32 : i32, i32
  }
  func.func @transform_1(%arg0: i32, %arg1: i32) -> (i32, i32) {
    %c0_i32 = arith.constant 0 : i32
    %c0_i32_0 = arith.constant 0 : i32
    %c0_i32_1 = arith.constant 0 : i32
    return %c0_i32, %c0_i32_0 : i32, i32
  }
  func.func @transform_2(%arg0: i32, %arg1: i32) -> (i32, i32, i32) {
    %c0_i32 = arith.constant 0 : i32
    %c0_i32_0 = arith.constant 0 : i32
    %c0_i32_1 = arith.constant 0 : i32
    return %arg0, %c0_i32, %c0_i32_0 : i32, i32, i32
  }
  func.func @transform_3(%arg0: i32, %arg1: i32) -> (i32, i32, i32) {
    %c0_i32 = arith.constant 0 : i32
    %c0_i32_0 = arith.constant 0 : i32
    %c0_i32_1 = arith.constant 0 : i32
    return %arg0, %c0_i32, %c0_i32_0 : i32, i32, i32
  }
  func.func @transform_4(%arg0: i32, %arg1: i32) -> (i32, i32, i32) {
    %c0_i32 = arith.constant 0 : i32
    %c0_i32_0 = arith.constant 0 : i32
    %c0_i32_1 = arith.constant 0 : i32
    return %arg0, %c0_i32, %c0_i32_0 : i32, i32, i32
  }
  func.func @transform_5(%arg0: i32, %arg1: i32) -> (i32, i32) {
    %0 = arith.muli %arg0, %arg1 : i32
    %c0_i32 = arith.constant 0 : i32
    %c0_i32_0 = arith.constant 0 : i32
    return %0, %c0_i32 : i32, i32
  }
}

</mosaic_0001>

<llo_original>
// kernel: tpu_custom_call.1
$region0: #{tpu_custom_call.1}
  #allocation0 [shape = 'u32[]', space=smem, size = 0x4, offset = 0x4, fixed_abs, tag = 'smem constant byte address 0x4 - core index']
  #allocation1 [shape = 'u32[144,128]{1,0:T(1,128)}', space=vmem, size = 0x12000, scoped, tag = 'internal scratch']
  #allocation2 [shape = 'bf16[128,128]{1,0:T(16,128)(2,1)}', space=vmem, size = 0x8000, scoped, tag = 'scratch operand']
  %s0 = inlined_call_operand.hbm [shape: bf16[128,128], index: 0, kind: input, shape index: {}]
  %s1 = inlined_call_operand.hbm [shape: bf16[128,128], index: 1, kind: input, shape index: {}]
  %s2 = inlined_call_operand.hbm [shape: bf16[2,128,128], index: 2, kind: input, shape index: {}]
  %s3 = inlined_call_operand.hbm [shape: bf16[2,128,128], index: 3, kind: input, shape index: {}]
  %s4 = inlined_call_operand.vmem [shape: f32[2,1,128], index: 4, kind: input, shape index: {}]
  %s5 = inlined_call_operand.hbm [shape: f32[128,128], index: 5, kind: output, shape index: {}]
  %s6 = sld [smem:[#allocation0]]
  $region77: #{tpu_custom_call.1} parent=0
    _
  %s8 = ssub.s32 1, %s6
  %s9 = scalar_select 0, %s8, %s6
  $region1: #{tpu_custom_call.1} parent=0
    #allocation3 [shape = 'u8[32768]{0}', space=vmem, size = 0x8000, scoped, tag = 'input window, operand 0']
    #allocation4 [shape = 's32[2]{0}', space=sflag, size = 0x8, scoped, tag = 'scoped memory for tpu_custom_call.1']
    #allocation5 [shape = 's32[2]{0}', space=sflag, size = 0x8, scoped, tag = 'scoped memory for tpu_custom_call.1']
    #allocation6 [shape = 'u8[32768]{0}', space=vmem, size = 0x8000, scoped, tag = 'input window, operand 1, single buffered']
    #allocation7 [shape = 's32[1]{0}', space=sflag, size = 0x4, scoped, tag = 'scoped memory for tpu_custom_call.1']
    #allocation8 [shape = 'u8[65536]{0}', space=vmem, size = 0x10000, scoped, tag = 'input window, operand 2']
    #allocation9 [shape = 'u8[65536]{0}', space=vmem, size = 0x10000, scoped, tag = 'input window, operand 3']
    #allocation10 [shape = 'u8[65536]{0}', space=vmem, size = 0x10000, scoped, tag = 'output window, operand 0']
    %10 = vsyncpa [#allocation4], 0
    %s11 = scalar_lea.sflag [#allocation4], 1
    %12 = vsyncpa %s11, 0
    %13 = vsyncpa [#allocation7], 0
    %14 = vsyncpa [#allocation5], 0
    %s15 = scalar_lea.sflag [#allocation5], 1
    %16 = vsyncpa %s15, 0
    loop: start=0, step=1, limit=6
    $region2: #{tpu_custom_call.1} parent=1 // loop_pre_header
      _
    $region3: #{tpu_custom_call.1} parent=1 // loop_header
      %s18 = sphi 0, %s22
      %p19 = scmp.ge.s32.totalorder %s18, 6
      %s25 = sphi 0, %s37
      %s26 = sphi 0, %s33
      %s27 = sphi 0, %s25
      %s28 = sphi 0, %s26
      %s29 = sphi 0, %s27
      %s30 = sphi 0, %s28
      %s40 = sphi 0, %s42
      %s43 = sphi 0, %s40
      %s44 = sphi 0, %s43
      %s60 = sphi 0, %s44
      %s64 = sphi 0, %s64
      %s66 = sphi 0, %s64
      %s67 = sphi 0, %s66
      %s81 = sphi 0, %s67
      %s87 = sphi 0, %s89
      %s90 = sphi 0, %s87
      %s91 = sphi 0, %s90
      %s107 = sphi 0, %s91
      %s113 = sphi 0, %s115
      %s116 = sphi 0, %s113
      %s117 = sphi 0, %s116
      %s133 = sphi 0, %s117
      %s139 = sphi 0, %s141
      %s142 = sphi 0, %s139
      %s143 = sphi 0, %s142
      %s159 = sphi 0, %s143
      %s167 = sphi 0, %s169
      %s170 = sphi 0, %s167
      %s171 = sphi 0, %s170
      %s187 = sphi 0, %s171
    $region4: #{tpu_custom_call.1} parent=1 // loop_header_branch
      %21 = sbr.rel (%p19) target = $region8
    $region5: #{tpu_custom_call.1} parent=1 // loop_body
      %s23 = ssub.s32 %s18, 1
      %s24 = ssub.s32 %s18, 2
      %s31 = sadd.s32 1, %s26
      %p32 = scmp.ge.s32.totalorder %s31, 2
      %s33 = scalar_select %p32, 0, %s31
      %s34 = sadd.s32 1, %s25
      %s35 = scalar_select %p32, %s34, %s25
      %p36 = scmp.ge.s32.totalorder %s35, 2
      %s37 = scalar_select %p36, 0, %s35
      %s38 = ssub.s32 %s26, %s33
      %p39 = scmp.eq.s32.totalorder %s38, 0
      %s41 = sadd.s32 %s40, 1
      %s42 = scalar_select %p39, %s40, %s41
      %p45 = pneg %p39
      %p46 = scmp.eq.s32.totalorder %s18, 3
      %p47 = por %p45, %p46
      %p48 = scmp.ne.s32.totalorder %s40, %s43
      %p49 = scmp.eq.s32.totalorder %s18, 0
      %p50 = por %p48, %p49
      %p51 = scmp.ne.s32.totalorder %s40, %s43
      %p52 = scmp.eq.s32.totalorder %s23, 3
      %p53 = por %p51, %p52
      %p54 = scmp.ne.s32.totalorder %s43, %s44
      %p55 = scmp.eq.s32.totalorder %s23, 0
      %p56 = por %p54, %p55
      %p57 = scmp.ne.s32.totalorder %s43, %s44
      %p58 = scmp.eq.s32.totalorder %s24, 3
      %p59 = por %p57, %p58
      %p61 = scmp.ne.s32.totalorder %s44, %s60
      %p62 = scmp.eq.s32.totalorder %s24, 0
      %p63 = por %p61, %p62
      %s65 = sadd.s32 %s64, 1
      %p68 = scmp.eq.s32.totalorder %s18, 3
      %p69 = scmp.ne.s32.totalorder %s64, %s66
      %p70 = scmp.eq.s32.totalorder %s18, 0
      %p71 = por %p69, %p70
      %p72 = scmp.ne.s32.totalorder %s64, %s66
      %p73 = scmp.eq.s32.totalorder %s23, 3
      %p74 = por %p72, %p73
      %p75 = scmp.ne.s32.totalorder %s66, %s67
      %p76 = scmp.eq.s32.totalorder %s23, 0
      %p77 = por %p75, %p76
      %p78 = scmp.ne.s32.totalorder %s66, %s67
      %p79 = scmp.eq.s32.totalorder %s24, 3
      %p80 = por %p78, %p79
      %p82 = scmp.ne.s32.totalorder %s67, %s81
      %p83 = scmp.eq.s32.totalorder %s24, 0
      %p84 = por %p82, %p83
      %s85 = ssub.s32 %s25, %s37
      %p86 = scmp.eq.s32.totalorder %s85, 0
      %s88 = sadd.s32 %s87, 1
      %s89 = scalar_select %p86, %s87, %s88
      %p92 = pneg %p86
      %p93 = scmp.eq.s32.totalorder %s18, 3
      %p94 = por %p92, %p93
      %p95 = scmp.ne.s32.totalorder %s87, %s90
      %p96 = scmp.eq.s32.totalorder %s18, 0
      %p97 = por %p95, %p96
      %p98 = scmp.ne.s32.totalorder %s87, %s90
      %p99 = scmp.eq.s32.totalorder %s23, 3
      %p100 = por %p98, %p99
      %p101 = scmp.ne.s32.totalorder %s90, %s91
      %p102 = scmp.eq.s32.totalorder %s23, 0
      %p103 = por %p101, %p102
      %p104 = scmp.ne.s32.totalorder %s90, %s91
      %p105 = scmp.eq.s32.totalorder %s24, 3
      %p106 = por %p104, %p105
      %p108 = scmp.ne.s32.totalorder %s91, %s107
      %p109 = scmp.eq.s32.totalorder %s24, 0
      %p110 = por %p108, %p109
      %s111 = ssub.s32 %s25, %s37
      %p112 = scmp.eq.s32.totalorder %s111, 0
      %s114 = sadd.s32 %s113, 1
      %s115 = scalar_select %p112, %s113, %s114
      %p118 = pneg %p112
      %p119 = scmp.eq.s32.totalorder %s18, 3
      %p120 = por %p118, %p119
      %p121 = scmp.ne.s32.totalorder %s113, %s116
      %p122 = scmp.eq.s32.totalorder %s18, 0
      %p123 = por %p121, %p122
      %p124 = scmp.ne.s32.totalorder %s113, %s116
      %p125 = scmp.eq.s32.totalorder %s23, 3
      %p126 = por %p124, %p125
      %p127 = scmp.ne.s32.totalorder %s116, %s117
      %p128 = scmp.eq.s32.totalorder %s23, 0
      %p129 = por %p127, %p128
      %p130 = scmp.ne.s32.totalorder %s116, %s117
      %p131 = scmp.eq.s32.totalorder %s24, 3
      %p132 = por %p130, %p131
      %p134 = scmp.ne.s32.totalorder %s117, %s133
      %p135 = scmp.eq.s32.totalorder %s24, 0
      %p136 = por %p134, %p135
      %s137 = ssub.s32 %s25, %s37
      %p138 = scmp.eq.s32.totalorder %s137, 0
      %s140 = sadd.s32 %s139, 1
      %s141 = scalar_select %p138, %s139, %s140
      %p144 = pneg %p138
      %p145 = scmp.eq.s32.totalorder %s18, 3
      %p146 = por %p144, %p145
      %p147 = scmp.ne.s32.totalorder %s139, %s142
      %p148 = scmp.eq.s32.totalorder %s18, 0
      %p149 = por %p147, %p148
      %p150 = scmp.ne.s32.totalorder %s139, %s142
      %p151 = scmp.eq.s32.totalorder %s23, 3
      %p152 = por %p150, %p151
      %p153 = scmp.ne.s32.totalorder %s142, %s143
      %p154 = scmp.eq.s32.totalorder %s23, 0
      %p155 = por %p153, %p154
      %p156 = scmp.ne.s32.totalorder %s142, %s143
      %p157 = scmp.eq.s32.totalorder %s24, 3
      %p158 = por %p156, %p157
      %p160 = scmp.ne.s32.totalorder %s143, %s159
      %p161 = scmp.eq.s32.totalorder %s24, 0
      %p162 = por %p160, %p161
      %s163 = smul.u32 %s25, %s26
      %s164 = smul.u32 %s37, %s33
      %s165 = ssub.s32 %s163, %s164
      %p166 = scmp.eq.s32.totalorder %s165, 0
      %s168 = sadd.s32 %s167, 1
      %s169 = scalar_select %p166, %s167, %s168
      %p172 = pneg %p166
      %p173 = scmp.eq.s32.totalorder %s18, 3
      %p174 = por %p172, %p173
      %p175 = scmp.ne.s32.totalorder %s167, %s170
      %p176 = scmp.eq.s32.totalorder %s18, 0
      %p177 = por %p175, %p176
      %p178 = scmp.ne.s32.totalorder %s167, %s170
      %p179 = scmp.eq.s32.totalorder %s23, 3
      %p180 = por %p178, %p179
      %p181 = scmp.ne.s32.totalorder %s170, %s171
      %p182 = scmp.eq.s32.totalorder %s23, 0
      %p183 = por %p181, %p182
      %p184 = scmp.ne.s32.totalorder %s170, %s171
      %p185 = scmp.eq.s32.totalorder %s24, 3
      %p186 = por %p184, %p185
      %p188 = scmp.ne.s32.totalorder %s171, %s187
      %p189 = scmp.eq.s32.totalorder %s24, 0
      %p190 = por %p188, %p189
      %p191 = scmp.le.s32.totalorder 1, %s18
      %p192 = scmp.lt.s32.totalorder %s18, 5
      %p193 = pnand %p191, %p192
      %p194 = pneg %p193
      // Predicated region
      $region9: #{tpu_custom_call.1} parent=5 // pred_check
        _
      $region10: #{tpu_custom_call.1} parent=5 // pred_check_branch
        %196 = sbr.rel (%p193) target = $region12
      $region11: #{tpu_custom_call.1} parent=5 // pred_region
        %s197 = ssub.s32 %s18, 1
        // Predicated region
        $region13: #{tpu_custom_call.1} parent=11 // pred_check
          %p198 = pneg %p77
        $region14: #{tpu_custom_call.1} parent=11 // pred_check_branch
          %200 = sbr.rel (%p198) target = $region16
        $region15: #{tpu_custom_call.1} parent=11 // pred_region
          %s202 = ssub.s32 1024, 1024
          %203 = vsyncadd [#allocation7], %s202
          %s204 = sshll.u32 [#allocation6], 4
          %s205 = int_to_ptr.vmem [resolvable:$true] %s204
          %210 = dma.hbm_to_vmem [thread:$0]  %s1, 1024, %s205, [#allocation7], 64, 64, 4
        $region16: #{tpu_custom_call.1} parent=11 // pred_fallthru
          _
      $region12: #{tpu_custom_call.1} parent=5 // pred_fallthru
        _
      %p211 = scmp.lt.s32.totalorder %s18, 4
      // Predicated region
      $region17: #{tpu_custom_call.1} parent=5 // pred_check
        %p212 = pneg %p211
      $region18: #{tpu_custom_call.1} parent=5 // pred_check_branch
        %214 = sbr.rel (%p212) target = $region20
      $region19: #{tpu_custom_call.1} parent=5 // pred_region
        // Predicated region
        $region21: #{tpu_custom_call.1} parent=19 // pred_check
          %p215 = pneg %p50
        $region22: #{tpu_custom_call.1} parent=19 // pred_check_branch
          %217 = sbr.rel (%p215) target = $region24
        $region23: #{tpu_custom_call.1} parent=19 // pred_region
          %s218 = sand.u32 %s18, 1
          %s219 = scalar_lea.sflag [#allocation4], %s218
          %s220 = sand.u32 %s40, 1
          %s221 = smul.addr %s220, 32
          %s222 = scalar_lea.vmem [#allocation3], %s221
          %s223 = smul.u32 8, %s26
          %s225 = ssub.s32 512, 512
          %226 = vsyncadd %s219, %s225
          %s227 = smul.addr %s223, 64
          %s228 = scalar_lea.hbm %s0, %s227
          %s229 = sshll.u32 %s222, 4
          %s230 = int_to_ptr.vmem [resolvable:$true] %s229
          %235 = dma.hbm_to_vmem [thread:$0]  %s228, 512, %s230, %s219, 64, 64, 4
        $region24: #{tpu_custom_call.1} parent=19 // pred_fallthru
          _
        // Predicated region
        $region25: #{tpu_custom_call.1} parent=19 // pred_check
          %p236 = pneg %p97
        $region26: #{tpu_custom_call.1} parent=19 // pred_check_branch
          %238 = sbr.rel (%p236) target = $region28
        $region27: #{tpu_custom_call.1} parent=19 // pred_region
          %s239 = sand.u32 %s18, 1
          %s240 = scalar_lea.sflag [#allocation4], %s239
          %s241 = sand.u32 %s87, 1
          %s242 = smul.addr %s241, 64
          %s243 = scalar_lea.vmem [#allocation8], %s242
          %s245 = ssub.s32 1024, 1024
          %246 = vsyncadd %s240, %s245
          %s247 = smul.addr %s25, 16
          %s248 = smul.addr %s247, 64
          %s249 = scalar_lea.hbm %s2, %s248
          %s250 = sshll.u32 %s243, 4
          %s251 = int_to_ptr.vmem [resolvable:$true] %s250
          %256 = dma.hbm_to_vmem [thread:$0]  %s249, 1024, %s251, %s240, 64, 64, 4
        $region28: #{tpu_custom_call.1} parent=19 // pred_fallthru
          _
        // Predicated region
        $region29: #{tpu_custom_call.1} parent=19 // pred_check
          %p257 = pneg %p123
        $region30: #{tpu_custom_call.1} parent=19 // pred_check_branch
          %259 = sbr.rel (%p257) target = $region32
        $region31: #{tpu_custom_call.1} parent=19 // pred_region
          %s260 = sand.u32 %s18, 1
          %s261 = scalar_lea.sflag [#allocation4], %s260
          %s262 = sand.u32 %s113, 1
          %s263 = smul.addr %s262, 64
          %s264 = scalar_lea.vmem [#allocation9], %s263
          %s266 = ssub.s32 1024, 1024
          %267 = vsyncadd %s261, %s266
          %s268 = smul.addr %s25, 16
          %s269 = smul.addr %s268, 64
          %s270 = scalar_lea.hbm %s3, %s269
          %s271 = sshll.u32 %s264, 4
          %s272 = int_to_ptr.vmem [resolvable:$true] %s271
          %277 = dma.hbm_to_vmem [thread:$0]  %s270, 1024, %s272, %s261, 64, 64, 4
        $region32: #{tpu_custom_call.1} parent=19 // pred_fallthru
          _
        // Predicated region
        $region33: #{tpu_custom_call.1} parent=19 // pred_check
          %p278 = pneg %p149
        $region34: #{tpu_custom_call.1} parent=19 // pred_check_branch
          %280 = sbr.rel (%p278) target = $region36
        $region35: #{tpu_custom_call.1} parent=19 // pred_region
          %p281 = scmp.lt.s32.totalorder %s25, 1
          %s282 = scalar_select %p281, %s25, 1
          %s283 = scalar_lea.vmem %s4, %s282
        $region36: #{tpu_custom_call.1} parent=19 // pred_fallthru
          _
      $region20: #{tpu_custom_call.1} parent=5 // pred_fallthru
        _
      %p284 = scmp.le.s32.totalorder 1, %s18
      %p285 = scmp.lt.s32.totalorder %s18, 5
      %p286 = pnand %p284, %p285
      %p287 = pneg %p286
      // Predicated region
      $region37: #{tpu_custom_call.1} parent=5 // pred_check
        _
      $region38: #{tpu_custom_call.1} parent=5 // pred_check_branch
        %289 = sbr.rel (%p286) target = $region40
      $region39: #{tpu_custom_call.1} parent=5 // pred_region
        %s290 = ssub.s32 %s18, 1
        %s291 = sand.u32 %s23, 1
        %s292 = scalar_lea.sflag [#allocation4], %s291
        %s293 = sand.u32 %s43, 1
        %s294 = smul.addr %s293, 32
        %s295 = scalar_lea.vmem [#allocation3], %s294
        // Predicated region
        $region41: #{tpu_custom_call.1} parent=39 // pred_check
          %p296 = pneg %p56
        $region42: #{tpu_custom_call.1} parent=39 // pred_check_branch
          %298 = sbr.rel (%p296) target = $region44
        $region43: #{tpu_custom_call.1} parent=39 // pred_region
          %299 = dma.done %s292, 512
        $region44: #{tpu_custom_call.1} parent=39 // pred_fallthru
          _
        // Predicated region
        $region45: #{tpu_custom_call.1} parent=39 // pred_check
          %p300 = pneg %p77
        $region46: #{tpu_custom_call.1} parent=39 // pred_check_branch
          %302 = sbr.rel (%p300) target = $region48
        $region47: #{tpu_custom_call.1} parent=39 // pred_region
          %303 = dma.done [#allocation7], 1024
        $region48: #{tpu_custom_call.1} parent=39 // pred_fallthru
          _
        %s304 = sand.u32 %s23, 1
        %s305 = scalar_lea.sflag [#allocation4], %s304
        %s306 = sand.u32 %s90, 1
        %s307 = smul.addr %s306, 64
        %s308 = scalar_lea.vmem [#allocation8], %s307
        // Predicated region
        $region49: #{tpu_custom_call.1} parent=39 // pred_check
          %p309 = pneg %p103
        $region50: #{tpu_custom_call.1} parent=39 // pred_check_branch
          %311 = sbr.rel (%p309) target = $region52
        $region51: #{tpu_custom_call.1} parent=39 // pred_region
          %312 = dma.done %s305, 1024
        $region52: #{tpu_custom_call.1} parent=39 // pred_fallthru
          _
        %s313 = sand.u32 %s23, 1
        %s314 = scalar_lea.sflag [#allocation4], %s313
        %s315 = sand.u32 %s116, 1
        %s316 = smul.addr %s315, 64
        %s317 = scalar_lea.vmem [#allocation9], %s316
        // Predicated region
        $region53: #{tpu_custom_call.1} parent=39 // pred_check
          %p318 = pneg %p129
        $region54: #{tpu_custom_call.1} parent=39 // pred_check_branch
          %320 = sbr.rel (%p318) target = $region56
        $region55: #{tpu_custom_call.1} parent=39 // pred_region
          %321 = dma.done %s314, 1024
        $region56: #{tpu_custom_call.1} parent=39 // pred_fallthru
          _
        %s322 = sand.u32 %s23, 1
        %s323 = scalar_lea.sflag [#allocation4], %s322
        %s324 = sand.u32 %s43, 1
        %s325 = smul.addr %s324, 32
        %s326 = scalar_lea.vmem [#allocation3], %s325
        %p327 = pneg %p56
        %p328 = pneg %p53
        %p329 = pneg %p77
        %p330 = pneg %p74
        %s331 = sand.u32 %s23, 1
        %s332 = scalar_lea.sflag [#allocation4], %s331
        %s333 = sand.u32 %s90, 1
        %s334 = smul.addr %s333, 64
        %s335 = scalar_lea.vmem [#allocation8], %s334
        %p336 = pneg %p103
        %p337 = pneg %p100
        %s338 = sand.u32 %s23, 1
        %s339 = scalar_lea.sflag [#allocation4], %s338
        %s340 = sand.u32 %s116, 1
        %s341 = smul.addr %s340, 64
        %s342 = scalar_lea.vmem [#allocation9], %s341
        %p343 = pneg %p129
        %p344 = pneg %p126
        %p345 = scmp.lt.s32.totalorder %s27, 1
        %s346 = scalar_select %p345, %s27, 1
        %s347 = scalar_lea.vmem %s4, %s346
        %p348 = pneg %p155
        %p349 = pneg %p152
        %p350 = pneg %p183
        %p351 = pneg %p180
        %s352 = sand.u32 %s170, 1
        %s353 = scalar_lea.sflag [#allocation5], %s352
        %s354 = sand.u32 %s170, 1
        %s355 = smul.addr %s354, 64
        %s356 = scalar_lea.vmem [#allocation10], %s355
        %s357 = smul.u32 8, %s28
        %p358 = scmp.lt.s32.totalorder %s27, 1
        %s359 = scalar_select %p358, %s27, 1
        %s360 = scalar_lea.vmem %s4, %s359
        %s361 = smul.u32 %s27, %s28
        %s362 = smul.u32 8, %s361
        %s364 = smul.u32 %s28, 64
        %v365 = vld [vmem:[%s295] sm:$0xf]
        %v366 = vld [vmem:[%s295 + $0x4] sm:$0xf]
        %v367 = vld [vmem:[%s295 + $0x8] sm:$0xf]
        %v368 = vld [vmem:[%s295 + $0xc] sm:$0xf]
        %v369 = vld [vmem:[%s295 + $0x10] sm:$0xf]
        %v370 = vld [vmem:[%s295 + $0x14] sm:$0xf]
        %v371 = vld [vmem:[%s295 + $0x18] sm:$0xf]
        %v372 = vld [vmem:[%s295 + $0x1c] sm:$0xf]
        %v373 = vld [vmem:[%s308] sm:$0xf]
        %v374 = vld [vmem:[%s308 + $0x4] sm:$0xf]
        %v375 = vld [vmem:[%s308 + $0x8] sm:$0xf]
        %v376 = vld [vmem:[%s308 + $0xc] sm:$0xf]
        %v377 = vld [vmem:[%s308 + $0x10] sm:$0xf]
        %v378 = vld [vmem:[%s308 + $0x14] sm:$0xf]
        %v379 = vld [vmem:[%s308 + $0x18] sm:$0xf]
        %v380 = vld [vmem:[%s308 + $0x1c] sm:$0xf]
        %v381 = vld [vmem:[%s308 + $0x20] sm:$0xf]
        %v382 = vld [vmem:[%s308 + $0x24] sm:$0xf]
        %v383 = vld [vmem:[%s308 + $0x28] sm:$0xf]
        %v384 = vld [vmem:[%s308 + $0x2c] sm:$0xf]
        %v385 = vld [vmem:[%s308 + $0x30] sm:$0xf]
        %v386 = vld [vmem:[%s308 + $0x34] sm:$0xf]
        %v387 = vld [vmem:[%s308 + $0x38] sm:$0xf]
        %v388 = vld [vmem:[%s308 + $0x3c] sm:$0xf]
        %v389 = vld [vmem:[%s317] sm:$0xf]
        %v390 = vld [vmem:[%s317 + $0x4] sm:$0xf]
        %v391 = vld [vmem:[%s317 + $0x8] sm:$0xf]
        %v392 = vld [vmem:[%s317 + $0xc] sm:$0xf]
        %v393 = vld [vmem:[%s317 + $0x10] sm:$0xf]
        %v394 = vld [vmem:[%s317 + $0x14] sm:$0xf]
        %v395 = vld [vmem:[%s317 + $0x18] sm:$0xf]
        %v396 = vld [vmem:[%s317 + $0x1c] sm:$0xf]
        %v397 = vld [vmem:[%s317 + $0x20] sm:$0xf]
        %v398 = vld [vmem:[%s317 + $0x24] sm:$0xf]
        %v399 = vld [vmem:[%s317 + $0x28] sm:$0xf]
        %v400 = vld [vmem:[%s317 + $0x2c] sm:$0xf]
        %v401 = vld [vmem:[%s317 + $0x30] sm:$0xf]
        %v402 = vld [vmem:[%s317 + $0x34] sm:$0xf]
        %v403 = vld [vmem:[%s317 + $0x38] sm:$0xf]
        %v404 = vld [vmem:[%s317 + $0x3c] sm:$0xf]
        %v405 = vld [vmem:[%s360] sm:$0x1]
        %p406 = scmp.eq.s32.totalorder %s27, 0
        // Predicated region
        $region57: #{tpu_custom_call.1} parent=39 // pred_check
          %p407 = pneg %p406
        $region58: #{tpu_custom_call.1} parent=39 // pred_check_branch
          %409 = sbr.rel (%p407) target = $region60
        $region59: #{tpu_custom_call.1} parent=39 // pred_region
          %v410 = vld [vmem:[#allocation6] sm:$0xf]
          %v411 = vld [vmem:[#allocation6 + $0x4] sm:$0xf]
          %v412 = vld [vmem:[#allocation6 + $0x8] sm:$0xf]
          %v413 = vld [vmem:[#allocation6 + $0xc] sm:$0xf]
          %v414 = vld [vmem:[#allocation6 + $0x10] sm:$0xf]
          %v415 = vld [vmem:[#allocation6 + $0x14] sm:$0xf]
          %v416 = vld [vmem:[#allocation6 + $0x18] sm:$0xf]
          %v417 = vld [vmem:[#allocation6 + $0x1c] sm:$0xf]
          %v418 = vld [vmem:[#allocation6 + $0x20] sm:$0xf]
          %v419 = vld [vmem:[#allocation6 + $0x24] sm:$0xf]
          %v420 = vld [vmem:[#allocation6 + $0x28] sm:$0xf]
          %v421 = vld [vmem:[#allocation6 + $0x2c] sm:$0xf]
          %v422 = vld [vmem:[#allocation6 + $0x30] sm:$0xf]
          %v423 = vld [vmem:[#allocation6 + $0x34] sm:$0xf]
          %v424 = vld [vmem:[#allocation6 + $0x38] sm:$0xf]
          %v425 = vld [vmem:[#allocation6 + $0x3c] sm:$0xf]
          %s426 = sshra.s32 %s364, 3
          %s427 = sand.u32 %s364, 7
          %s428 = smul.addr %s426, 4
          %s429 = scalar_lea.vmem [#allocation6], %s428
          %v430 = vld [vmem:[%s429] sm:$0xf]
          %v431 = vld [vmem:[%s429 + $0x4] sm:$0xf]
          %v432 = vld [vmem:[%s429 + $0x8] sm:$0xf]
          %v433 = vld [vmem:[%s429 + $0xc] sm:$0xf]
          %v434 = vld [vmem:[%s429 + $0x10] sm:$0xf]
          %v435 = vld [vmem:[%s429 + $0x14] sm:$0xf]
          %v436 = vld [vmem:[%s429 + $0x18] sm:$0xf]
          %v437 = vld [vmem:[%s429 + $0x1c] sm:$0xf]
          %v446 = vunpack.c.l.b16 %v365
          %v447 = vunpack.c.l.b16 %v366
          %v448 = vunpack.c.l.b16 %v367
          %v449 = vunpack.c.l.b16 %v368
          %v450 = vunpack.c.l.b16 %v369
          %v451 = vunpack.c.l.b16 %v370
          %v452 = vunpack.c.l.b16 %v371
          %v453 = vunpack.c.l.b16 %v372
          %v454 = vpack.c.b16 %v447, %v446
          %v455 = vpack.c.b16 %v449, %v448
          %v456 = vpack.c.b16 %v451, %v450
          %v457 = vpack.c.b16 %v453, %v452
          %v478 = vunpack.c.l.b16 %v410
          %v479 = vunpack.c.l.b16 %v411
          %v480 = vunpack.c.l.b16 %v412
          %v481 = vunpack.c.l.b16 %v413
          %v482 = vunpack.c.l.b16 %v414
          %v483 = vunpack.c.l.b16 %v415
          %v484 = vunpack.c.l.b16 %v416
          %v485 = vunpack.c.l.b16 %v417
          %v486 = vunpack.c.l.b16 %v418
          %v487 = vunpack.c.l.b16 %v419
          %v488 = vunpack.c.l.b16 %v420
          %v489 = vunpack.c.l.b16 %v421
          %v490 = vunpack.c.l.b16 %v422
          %v491 = vunpack.c.l.b16 %v423
          %v492 = vunpack.c.l.b16 %v424
          %v493 = vunpack.c.l.b16 %v425
          %v494 = vpack.c.b16 %v479, %v478
          %v495 = vpack.c.b16 %v481, %v480
          %v496 = vpack.c.b16 %v483, %v482
          %v497 = vpack.c.b16 %v485, %v484
          %v498 = vpack.c.b16 %v487, %v486
          %v499 = vpack.c.b16 %v489, %v488
          %v500 = vpack.c.b16 %v491, %v490
          %v501 = vpack.c.b16 %v493, %v492
          %510 = vmatprep.subr.bf16.mxu0 0
          %511 = vmatpush1.bf16.msra.mxu0 %v494
          %512 = vmatprep.subr.bf16.mxu0 0
          %513 = vmatpush1.bf16.msra.mxu0 %v495
          %514 = vmatprep.subr.bf16.mxu0 0
          %515 = vmatpush1.bf16.msra.mxu0 %v496
          %516 = vmatprep.subr.bf16.mxu0 0
          %517 = vmatpush1.bf16.msra.mxu0 %v497
          %518 = vmatprep.subr.bf16.mxu0 0
          %519 = vmatpush1.bf16.msra.mxu0 %v498
          %520 = vmatprep.subr.bf16.mxu0 0
          %521 = vmatpush1.bf16.msra.mxu0 %v499
          %522 = vmatprep.subr.bf16.mxu0 0
          %523 = vmatpush1.bf16.msra.mxu0 %v500
          %524 = vmatprep.subr.bf16.mxu0 0
          %525 = vmatpush1.bf16.msra.mxu0 %v501
          %526 = vmatprep.subr.bf16.mxu0 0
          %527 = vmatpush1.bf16.msra.mxu0 0
          %528 = vmatprep.subr.bf16.mxu0 0
          %529 = vmatpush1.bf16.msra.mxu0 0
          %530 = vmatprep.subr.bf16.mxu0 0
          %531 = vmatpush1.bf16.msra.mxu0 0
          %532 = vmatprep.subr.bf16.mxu0 0
          %533 = vmatpush1.bf16.msra.mxu0 0
          %534 = vmatprep.subr.bf16.mxu0 0
          %535 = vmatpush1.bf16.msra.mxu0 0
          %536 = vmatprep.subr.bf16.mxu0 0
          %537 = vmatpush1.bf16.msra.mxu0 0
          %538 = vmatprep.subr.bf16.mxu0 0
          %539 = vmatpush1.bf16.msra.mxu0 0
          %540 = vmatprep.subr.bf16.mxu0 0
          %541 = vmatpush1.bf16.msra.mxu0 0
          %542 = vmatprep.mubr.bf16.mxu0 0
          %543 = vmatmul.mubr.bf16.gmra.mrb[0].mxu0 %v454
          %v544 = vpop.f32.mrb[0].mxu0
          %v545 = vadd.f32 0.0, %v544
          %v546 = vpop.f32.mrb[0].mxu0
          %v547 = vpop.f32.mrb[0].mxu0
          %v548 = vadd.f32 0.0, %v547
          %v549 = vpop.f32.mrb[0].mxu0
          %550 = vmatprep.mubr.bf16.mxu0 0
          %551 = vmatmul.mubr.bf16.gmra.mrb[0].mxu0 %v455
          %v552 = vpop.f32.mrb[0].mxu0
          %v553 = vadd.f32 0.0, %v552
          %v554 = vpop.f32.mrb[0].mxu0
          %v555 = vpop.f32.mrb[0].mxu0
          %v556 = vadd.f32 0.0, %v555
          %v557 = vpop.f32.mrb[0].mxu0
          %558 = vmatprep.mubr.bf16.mxu0 0
          %559 = vmatmul.mubr.bf16.gmra.mrb[0].mxu0 %v456
          %v560 = vpop.f32.mrb[0].mxu0
          %v561 = vadd.f32 0.0, %v560
          %v562 = vpop.f32.mrb[0].mxu0
          %v563 = vpop.f32.mrb[0].mxu0
          %v564 = vadd.f32 0.0, %v563
          %v565 = vpop.f32.mrb[0].mxu0
          %566 = vmatprep.mubr.bf16.mxu0 0
          %567 = vmatmul.mubr.bf16.gmra.mrb[0].mxu0 %v457
          %v568 = vpop.f32.mrb[0].mxu0
          %v569 = vadd.f32 0.0, %v568
          %v570 = vpop.f32.mrb[0].mxu0
          %v571 = vpop.f32.mrb[0].mxu0
          %v572 = vadd.f32 0.0, %v571
          %v573 = vpop.f32.mrb[0].mxu0
          %574 = vdwg.mxu0
          %v575 = vmax.f32 %v545, 1.0
          %v576 = vmax.f32 %v548, 1.0
          %v577 = vmax.f32 %v553, 1.0
          %v578 = vmax.f32 %v556, 1.0
          %v579 = vmax.f32 %v561, 1.0
          %v580 = vmax.f32 %v564, 1.0
          %v581 = vmax.f32 %v569, 1.0
          %v582 = vmax.f32 %v572, 1.0
          %v583 = vrcp.pop %v575
          %v584 = vmul.f32 1.0, %v583
          %v585 = vrcp.pop %v576
          %v586 = vmul.f32 1.0, %v585
          %v587 = vrcp.pop %v577
          %v588 = vmul.f32 1.0, %v587
          %v589 = vrcp.pop %v578
          %v590 = vmul.f32 1.0, %v589
          %v591 = vrcp.pop %v579
          %v592 = vmul.f32 1.0, %v591
          %v593 = vrcp.pop %v580
          %v594 = vmul.f32 1.0, %v593
          %v595 = vrcp.pop %v581
          %v596 = vmul.f32 1.0, %v595
          %v597 = vrcp.pop %v582
          %v598 = vmul.f32 1.0, %v597
          %600 = vset.pattern.permute.xlu0 127
          %601 = vperm.xlu0 %600, %v584
          %v602 = vpop.permute.xlu0 %601
          %605 = vset.pattern.permute.xlu0 127
          %606 = vperm.xlu0 %605, %v586
          %v607 = vpop.permute.xlu0 %606
          %610 = vset.pattern.permute.xlu0 127
          %611 = vperm.xlu0 %610, %v588
          %v612 = vpop.permute.xlu0 %611
          %615 = vset.pattern.permute.xlu0 127
          %616 = vperm.xlu0 %615, %v590
          %v617 = vpop.permute.xlu0 %616
          %620 = vset.pattern.permute.xlu0 127
          %621 = vperm.xlu0 %620, %v592
          %v622 = vpop.permute.xlu0 %621
          %625 = vset.pattern.permute.xlu0 127
          %626 = vperm.xlu0 %625, %v594
          %v627 = vpop.permute.xlu0 %626
          %630 = vset.pattern.permute.xlu0 127
          %631 = vperm.xlu0 %630, %v596
          %v632 = vpop.permute.xlu0 %631
          %635 = vset.pattern.permute.xlu0 127
          %636 = vperm.xlu0 %635, %v598
          %v637 = vpop.permute.xlu0 %636
          %v639 = vmul.f32 %v545, %v602
          %v640 = vmul.f32 %v548, %v607
          %v641 = vmul.f32 %v553, %v612
          %v642 = vmul.f32 %v556, %v617
          %v643 = vmul.f32 %v561, %v622
          %v644 = vmul.f32 %v564, %v627
          %v645 = vmul.f32 %v569, %v632
          %v646 = vmul.f32 %v572, %v637
          %v647 = vpack.c.bf16 %v640, %v639
          %v648 = vpack.c.bf16 %v642, %v641
          %v649 = vpack.c.bf16 %v644, %v643
          %v650 = vpack.c.bf16 %v646, %v645
          %v667 = vunpack.c.l.b16 %v389
          %v668 = vunpack.c.l.b16 %v390
          %v669 = vunpack.c.l.b16 %v391
          %v670 = vunpack.c.l.b16 %v392
          %v671 = vunpack.c.l.b16 %v393
          %v672 = vunpack.c.l.b16 %v394
          %v673 = vunpack.c.l.b16 %v395
          %v674 = vunpack.c.l.b16 %v396
          %v675 = vunpack.c.l.b16 %v397
          %v676 = vunpack.c.l.b16 %v398
          %v677 = vunpack.c.l.b16 %v399
          %v678 = vunpack.c.l.b16 %v400
          %v679 = vunpack.c.l.b16 %v401
          %v680 = vunpack.c.l.b16 %v402
          %v681 = vunpack.c.l.b16 %v403
          %v682 = vunpack.c.l.b16 %v404
          %v683 = vpack.c.b16 %v668, %v667
          %v684 = vpack.c.b16 %v670, %v669
          %v685 = vpack.c.b16 %v672, %v671
          %v686 = vpack.c.b16 %v674, %v673
          %v687 = vpack.c.b16 %v676, %v675
          %v688 = vpack.c.b16 %v678, %v677
          %v689 = vpack.c.b16 %v680, %v679
          %v690 = vpack.c.b16 %v682, %v681
          %699 = vmatprep.subr.bf16.mxu0 0
          %700 = vmatpush1.bf16.msra.mxu0 %v683
          %701 = vmatprep.subr.bf16.mxu0 0
          %702 = vmatpush1.bf16.msra.mxu0 %v684
          %703 = vmatprep.subr.bf16.mxu0 0
          %704 = vmatpush1.bf16.msra.mxu0 %v685
          %705 = vmatprep.subr.bf16.mxu0 0
          %706 = vmatpush1.bf16.msra.mxu0 %v686
          %707 = vmatprep.subr.bf16.mxu0 0
          %708 = vmatpush1.bf16.msra.mxu0 %v687
          %709 = vmatprep.subr.bf16.mxu0 0
          %710 = vmatpush1.bf16.msra.mxu0 %v688
          %711 = vmatprep.subr.bf16.mxu0 0
          %712 = vmatpush1.bf16.msra.mxu0 %v689
          %713 = vmatprep.subr.bf16.mxu0 0
          %714 = vmatpush1.bf16.msra.mxu0 %v690
          %715 = vmatprep.subr.bf16.mxu0 0
          %716 = vmatpush1.bf16.msra.mxu0 0
          %717 = vmatprep.subr.bf16.mxu0 0
          %718 = vmatpush1.bf16.msra.mxu0 0
          %719 = vmatprep.subr.bf16.mxu0 0
          %720 = vmatpush1.bf16.msra.mxu0 0
          %721 = vmatprep.subr.bf16.mxu0 0
          %722 = vmatpush1.bf16.msra.mxu0 0
          %723 = vmatprep.subr.bf16.mxu0 0
          %724 = vmatpush1.bf16.msra.mxu0 0
          %725 = vmatprep.subr.bf16.mxu0 0
          %726 = vmatpush1.bf16.msra.mxu0 0
          %727 = vmatprep.subr.bf16.mxu0 0
          %728 = vmatpush1.bf16.msra.mxu0 0
          %729 = vmatprep.subr.bf16.mxu0 0
          %730 = vmatpush1.bf16.msra.mxu0 0
          %731 = vmatprep.mubr.bf16.mxu0 0
          %732 = vmatmul.mubr.bf16.gmra.mrb[0].mxu0 %v647
          %v733 = vpop.f32.mrb[0].mxu0
          %v734 = vadd.f32 0.0, %v733
          %v735 = vpop.f32.mrb[0].mxu0
          %v736 = vpop.f32.mrb[0].mxu0
          %v737 = vadd.f32 0.0, %v736
          %v738 = vpop.f32.mrb[0].mxu0
          %739 = vmatprep.mubr.bf16.mxu0 0
          %740 = vmatmul.mubr.bf16.gmra.mrb[0].mxu0 %v648
          %v741 = vpop.f32.mrb[0].mxu0
          %v742 = vadd.f32 0.0, %v741
          %v743 = vpop.f32.mrb[0].mxu0
          %v744 = vpop.f32.mrb[0].mxu0
          %v745 = vadd.f32 0.0, %v744
          %v746 = vpop.f32.mrb[0].mxu0
          %747 = vmatprep.mubr.bf16.mxu0 0
          %748 = vmatmul.mubr.bf16.gmra.mrb[0].mxu0 %v649
          %v749 = vpop.f32.mrb[0].mxu0
          %v750 = vadd.f32 0.0, %v749
          %v751 = vpop.f32.mrb[0].mxu0
          %v752 = vpop.f32.mrb[0].mxu0
          %v753 = vadd.f32 0.0, %v752
          %v754 = vpop.f32.mrb[0].mxu0
          %755 = vmatprep.mubr.bf16.mxu0 0
          %756 = vmatmul.mubr.bf16.gmra.mrb[0].mxu0 %v650
          %v757 = vpop.f32.mrb[0].mxu0
          %v758 = vadd.f32 0.0, %v757
          %v759 = vpop.f32.mrb[0].mxu0
          %v760 = vpop.f32.mrb[0].mxu0
          %v761 = vadd.f32 0.0, %v760
          %v762 = vpop.f32.mrb[0].mxu0
          %763 = vdwg.mxu0
          %v772 = vunpack.c.l.b16 %v430
          %v773 = vunpack.c.l.b16 %v431
          %v774 = vunpack.c.l.b16 %v432
          %v775 = vunpack.c.l.b16 %v433
          %v776 = vunpack.c.l.b16 %v434
          %v777 = vunpack.c.l.b16 %v435
          %v778 = vunpack.c.l.b16 %v436
          %v779 = vunpack.c.l.b16 %v437
          %v780 = vpack.c.b16 %v773, %v772
          %v781 = vpack.c.b16 %v775, %v774
          %v782 = vpack.c.b16 %v777, %v776
          %v783 = vpack.c.b16 %v779, %v778
          %v804 = vunpack.c.l.b16 %v373
          %v805 = vunpack.c.l.b16 %v374
          %v806 = vunpack.c.l.b16 %v375
          %v807 = vunpack.c.l.b16 %v376
          %v808 = vunpack.c.l.b16 %v377
          %v809 = vunpack.c.l.b16 %v378
          %v810 = vunpack.c.l.b16 %v379
          %v811 = vunpack.c.l.b16 %v380
          %v812 = vunpack.c.l.b16 %v381
          %v813 = vunpack.c.l.b16 %v382
          %v814 = vunpack.c.l.b16 %v383
          %v815 = vunpack.c.l.b16 %v384
          %v816 = vunpack.c.l.b16 %v385
          %v817 = vunpack.c.l.b16 %v386
          %v818 = vunpack.c.l.b16 %v387
          %v819 = vunpack.c.l.b16 %v388
          %v820 = vpack.c.b16 %v805, %v804
          %v821 = vpack.c.b16 %v807, %v806
          %v822 = vpack.c.b16 %v809, %v808
          %v823 = vpack.c.b16 %v811, %v810
          %v824 = vpack.c.b16 %v813, %v812
          %v825 = vpack.c.b16 %v815, %v814
          %v826 = vpack.c.b16 %v817, %v816
          %v827 = vpack.c.b16 %v819, %v818
          %836 = vmatprep.subr.bf16.mxu0 0
          %837 = vmatpush1.bf16.msra.mxu0 %v820
          %838 = vmatprep.subr.bf16.mxu0 0
          %839 = vmatpush1.bf16.msra.mxu0 %v821
          %840 = vmatprep.subr.bf16.mxu0 0
          %841 = vmatpush1.bf16.msra.mxu0 %v822
          %842 = vmatprep.subr.bf16.mxu0 0
          %843 = vmatpush1.bf16.msra.mxu0 %v823
          %844 = vmatprep.subr.bf16.mxu0 0
          %845 = vmatpush1.bf16.msra.mxu0 %v824
          %846 = vmatprep.subr.bf16.mxu0 0
          %847 = vmatpush1.bf16.msra.mxu0 %v825
          %848 = vmatprep.subr.bf16.mxu0 0
          %849 = vmatpush1.bf16.msra.mxu0 %v826
          %850 = vmatprep.subr.bf16.mxu0 0
          %851 = vmatpush1.bf16.msra.mxu0 %v827
          %852 = vmatprep.subr.bf16.mxu0 0
          %853 = vmatpush1.bf16.msra.mxu0 0
          %854 = vmatprep.subr.bf16.mxu0 0
          %855 = vmatpush1.bf16.msra.mxu0 0
          %856 = vmatprep.subr.bf16.mxu0 0
          %857 = vmatpush1.bf16.msra.mxu0 0
          %858 = vmatprep.subr.bf16.mxu0 0
          %859 = vmatpush1.bf16.msra.mxu0 0
          %860 = vmatprep.subr.bf16.mxu0 0
          %861 = vmatpush1.bf16.msra.mxu0 0
          %862 = vmatprep.subr.bf16.mxu0 0
          %863 = vmatpush1.bf16.msra.mxu0 0
          %864 = vmatprep.subr.bf16.mxu0 0
          %865 = vmatpush1.bf16.msra.mxu0 0
          %866 = vmatprep.subr.bf16.mxu0 0
          %867 = vmatpush1.bf16.msra.mxu0 0
          %868 = vmatprep.mubr.bf16.mxu0 0
          %869 = vmatmul.mubr.bf16.gmra.mrb[0].mxu0 %v780
          %v870 = vpop.f32.mrb[0].mxu0
          %v871 = vadd.f32 %v734, %v870
          %v872 = vpop.f32.mrb[0].mxu0
          %v873 = vpop.f32.mrb[0].mxu0
          %v874 = vadd.f32 %v737, %v873
          %v875 = vpop.f32.mrb[0].mxu0
          %876 = vmatprep.mubr.bf16.mxu0 0
          %877 = vmatmul.mubr.bf16.gmra.mrb[0].mxu0 %v781
          %v878 = vpop.f32.mrb[0].mxu0
          %v879 = vadd.f32 %v742, %v878
          %v880 = vpop.f32.mrb[0].mxu0
          %v881 = vpop.f32.mrb[0].mxu0
          %v882 = vadd.f32 %v745, %v881
          %v883 = vpop.f32.mrb[0].mxu0
          %884 = vmatprep.mubr.bf16.mxu0 0
          %885 = vmatmul.mubr.bf16.gmra.mrb[0].mxu0 %v782
          %v886 = vpop.f32.mrb[0].mxu0
          %v887 = vadd.f32 %v750, %v886
          %v888 = vpop.f32.mrb[0].mxu0
          %v889 = vpop.f32.mrb[0].mxu0
          %v890 = vadd.f32 %v753, %v889
          %v891 = vpop.f32.mrb[0].mxu0
          %892 = vmatprep.mubr.bf16.mxu0 0
          %893 = vmatmul.mubr.bf16.gmra.mrb[0].mxu0 %v783
          %v894 = vpop.f32.mrb[0].mxu0
          %v895 = vadd.f32 %v758, %v894
          %v896 = vpop.f32.mrb[0].mxu0
          %v897 = vpop.f32.mrb[0].mxu0
          %v898 = vadd.f32 %v761, %v897
          %v899 = vpop.f32.mrb[0].mxu0
          %900 = vdwg.mxu0
          %v902 = vlaneseq
          %v903 = vshrl.u32 %v902, 7
          %v904 = vsub.s32 0, %v903
          %v905 = vrot.slane %v405, %v904
          %v907 = vadd.f32 %v871, %v905
          %v908 = vadd.f32 %v874, %v905
          %v909 = vadd.f32 %v879, %v905
          %v910 = vadd.f32 %v882, %v905
          %v911 = vadd.f32 %v887, %v905
          %v912 = vadd.f32 %v890, %v905
          %v913 = vadd.f32 %v895, %v905
          %v914 = vadd.f32 %v898, %v905
          %v915 = vmax.f32 %v907, 0.0
          %v916 = vmax.f32 %v908, 0.0
          %v917 = vmax.f32 %v909, 0.0
          %v918 = vmax.f32 %v910, 0.0
          %v919 = vmax.f32 %v911, 0.0
          %v920 = vmax.f32 %v912, 0.0
          %v921 = vmax.f32 %v913, 0.0
          %v922 = vmax.f32 %v914, 0.0
          %v923 = vpack.c.bf16 %v916, %v915
          %v924 = vpack.c.bf16 %v918, %v917
          %v925 = vpack.c.bf16 %v920, %v919
          %v926 = vpack.c.bf16 %v922, %v921
          %s927 = sshra.s32 %s364, 4
          %s928 = sand.u32 %s364, 15
          %s929 = smul.addr %s927, 8
          %s930 = scalar_lea.vmem [#allocation2], %s929
          %931 = vst [vmem:[%s930] sm:$0xff] %v923
          %932 = vst [vmem:[%s930 + $0x8] sm:$0xff] %v924
          %933 = vst [vmem:[%s930 + $0x10] sm:$0xff] %v925
          %934 = vst [vmem:[%s930 + $0x18] sm:$0xff] %v926
        $region60: #{tpu_custom_call.1} parent=39 // pred_fallthru
          _
        %p935 = scmp.eq.s32.totalorder %s27, 1
        // Predicated region
        $region61: #{tpu_custom_call.1} parent=39 // pred_check
          %p936 = pneg %p935
        $region62: #{tpu_custom_call.1} parent=39 // pred_check_branch
          %938 = sbr.rel (%p936) target = $region64
        $region63: #{tpu_custom_call.1} parent=39 // pred_region
          %v939 = vld [vmem:[#allocation2] sm:$0xff]
          %v940 = vld [vmem:[#allocation2 + $0x8] sm:$0xff]
          %v941 = vld [vmem:[#allocation2 + $0x10] sm:$0xff]
          %v942 = vld [vmem:[#allocation2 + $0x18] sm:$0xff]
          %v943 = vld [vmem:[#allocation2 + $0x20] sm:$0xff]
          %v944 = vld [vmem:[#allocation2 + $0x28] sm:$0xff]
          %v945 = vld [vmem:[#allocation2 + $0x30] sm:$0xff]
          %v946 = vld [vmem:[#allocation2 + $0x38] sm:$0xff]
          %s947 = sshra.s32 %s364, 4
          %s948 = sand.u32 %s364, 15
          %s949 = smul.addr %s947, 8
          %s950 = scalar_lea.vmem [#allocation2], %s949
          %v951 = vld [vmem:[%s950] sm:$0xff]
          %v952 = vld [vmem:[%s950 + $0x8] sm:$0xff]
          %v953 = vld [vmem:[%s950 + $0x10] sm:$0xff]
          %v954 = vld [vmem:[%s950 + $0x18] sm:$0xff]
          %v963 = vunpack.c.l.b16 %v365
          %v964 = vunpack.c.l.b16 %v366
          %v965 = vunpack.c.l.b16 %v367
          %v966 = vunpack.c.l.b16 %v368
          %v967 = vunpack.c.l.b16 %v369
          %v968 = vunpack.c.l.b16 %v370
          %v969 = vunpack.c.l.b16 %v371
          %v970 = vunpack.c.l.b16 %v372
          %v971 = vpack.c.b16 %v964, %v963
          %v972 = vpack.c.b16 %v966, %v965
          %v973 = vpack.c.b16 %v968, %v967
          %v974 = vpack.c.b16 %v970, %v969
          %979 = vmatprep.subr.bf16.mxu0 0
          %980 = vmatpush1.bf16.msra.mxu0 %v939
          %981 = vmatprep.subr.bf16.mxu0 0
          %982 = vmatpush1.bf16.msra.mxu0 %v940
          %983 = vmatprep.subr.bf16.mxu0 0
          %984 = vmatpush1.bf16.msra.mxu0 %v941
          %985 = vmatprep.subr.bf16.mxu0 0
          %986 = vmatpush1.bf16.msra.mxu0 %v942
          %987 = vmatprep.subr.bf16.mxu0 0
          %988 = vmatpush1.bf16.msra.mxu0 %v943
          %989 = vmatprep.subr.bf16.mxu0 0
          %990 = vmatpush1.bf16.msra.mxu0 %v944
          %991 = vmatprep.subr.bf16.mxu0 0
          %992 = vmatpush1.bf16.msra.mxu0 %v945
          %993 = vmatprep.subr.bf16.mxu0 0
          %994 = vmatpush1.bf16.msra.mxu0 %v946
          %995 = vmatprep.subr.bf16.mxu0 0
          %996 = vmatpush1.bf16.msra.mxu0 0
          %997 = vmatprep.subr.bf16.mxu0 0
          %998 = vmatpush1.bf16.msra.mxu0 0
          %999 = vmatprep.subr.bf16.mxu0 0
          %1000 = vmatpush1.bf16.msra.mxu0 0
          %1001 = vmatprep.subr.bf16.mxu0 0
          %1002 = vmatpush1.bf16.msra.mxu0 0
          %1003 = vmatprep.subr.bf16.mxu0 0
          %1004 = vmatpush1.bf16.msra.mxu0 0
          %1005 = vmatprep.subr.bf16.mxu0 0
          %1006 = vmatpush1.bf16.msra.mxu0 0
          %1007 = vmatprep.subr.bf16.mxu0 0
          %1008 = vmatpush1.bf16.msra.mxu0 0
          %1009 = vmatprep.subr.bf16.mxu0 0
          %1010 = vmatpush1.bf16.msra.mxu0 0
          %1011 = vmatprep.mubr.bf16.mxu0 0
          %1012 = vmatmul.mubr.bf16.gmra.mrb[0].mxu0 %v971
          %v1013 = vpop.f32.mrb[0].mxu0
          %v1014 = vadd.f32 0.0, %v1013
          %v1015 = vpop.f32.mrb[0].mxu0
          %v1016 = vpop.f32.mrb[0].mxu0
          %v1017 = vadd.f32 0.0, %v1016
          %v1018 = vpop.f32.mrb[0].mxu0
          %1019 = vmatprep.mubr.bf16.mxu0 0
          %1020 = vmatmul.mubr.bf16.gmra.mrb[0].mxu0 %v972
          %v1021 = vpop.f32.mrb[0].mxu0
          %v1022 = vadd.f32 0.0, %v1021
          %v1023 = vpop.f32.mrb[0].mxu0
          %v1024 = vpop.f32.mrb[0].mxu0
          %v1025 = vadd.f32 0.0, %v1024
          %v1026 = vpop.f32.mrb[0].mxu0
          %1027 = vmatprep.mubr.bf16.mxu0 0
          %1028 = vmatmul.mubr.bf16.gmra.mrb[0].mxu0 %v973
          %v1029 = vpop.f32.mrb[0].mxu0
          %v1030 = vadd.f32 0.0, %v1029
          %v1031 = vpop.f32.mrb[0].mxu0
          %v1032 = vpop.f32.mrb[0].mxu0
          %v1033 = vadd.f32 0.0, %v1032
          %v1034 = vpop.f32.mrb[0].mxu0
          %1035 = vmatprep.mubr.bf16.mxu0 0
          %1036 = vmatmul.mubr.bf16.gmra.mrb[0].mxu0 %v974
          %v1037 = vpop.f32.mrb[0].mxu0
          %v1038 = vadd.f32 0.0, %v1037
          %v1039 = vpop.f32.mrb[0].mxu0
          %v1040 = vpop.f32.mrb[0].mxu0
          %v1041 = vadd.f32 0.0, %v1040
          %v1042 = vpop.f32.mrb[0].mxu0
          %1043 = vdwg.mxu0
          %v1044 = vmax.f32 %v1014, 1.0
          %v1045 = vmax.f32 %v1017, 1.0
          %v1046 = vmax.f32 %v1022, 1.0
          %v1047 = vmax.f32 %v1025, 1.0
          %v1048 = vmax.f32 %v1030, 1.0
          %v1049 = vmax.f32 %v1033, 1.0
          %v1050 = vmax.f32 %v1038, 1.0
          %v1051 = vmax.f32 %v1041, 1.0
          %v1052 = vrcp.pop %v1044
          %v1053 = vmul.f32 1.0, %v1052
          %v1054 = vrcp.pop %v1045
          %v1055 = vmul.f32 1.0, %v1054
          %v1056 = vrcp.pop %v1046
          %v1057 = vmul.f32 1.0, %v1056
          %v1058 = vrcp.pop %v1047
          %v1059 = vmul.f32 1.0, %v1058
          %v1060 = vrcp.pop %v1048
          %v1061 = vmul.f32 1.0, %v1060
          %v1062 = vrcp.pop %v1049
          %v1063 = vmul.f32 1.0, %v1062
          %v1064 = vrcp.pop %v1050
          %v1065 = vmul.f32 1.0, %v1064
          %v1066 = vrcp.pop %v1051
          %v1067 = vmul.f32 1.0, %v1066
          %1069 = vset.pattern.permute.xlu0 127
          %1070 = vperm.xlu0 %1069, %v1053
          %v1071 = vpop.permute.xlu0 %1070
          %1074 = vset.pattern.permute.xlu0 127
          %1075 = vperm.xlu0 %1074, %v1055
          %v1076 = vpop.permute.xlu0 %1075
          %1079 = vset.pattern.permute.xlu0 127
          %1080 = vperm.xlu0 %1079, %v1057
          %v1081 = vpop.permute.xlu0 %1080
          %1084 = vset.pattern.permute.xlu0 127
          %1085 = vperm.xlu0 %1084, %v1059
          %v1086 = vpop.permute.xlu0 %1085
          %1089 = vset.pattern.permute.xlu0 127
          %1090 = vperm.xlu0 %1089, %v1061
          %v1091 = vpop.permute.xlu0 %1090
          %1094 = vset.pattern.permute.xlu0 127
          %1095 = vperm.xlu0 %1094, %v1063
          %v1096 = vpop.permute.xlu0 %1095
          %1099 = vset.pattern.permute.xlu0 127
          %1100 = vperm.xlu0 %1099, %v1065
          %v1101 = vpop.permute.xlu0 %1100
          %1104 = vset.pattern.permute.xlu0 127
          %1105 = vperm.xlu0 %1104, %v1067
          %v1106 = vpop.permute.xlu0 %1105
          %v1108 = vmul.f32 %v1014, %v1071
          %v1109 = vmul.f32 %v1017, %v1076
          %v1110 = vmul.f32 %v1022, %v1081
          %v1111 = vmul.f32 %v1025, %v1086
          %v1112 = vmul.f32 %v1030, %v1091
          %v1113 = vmul.f32 %v1033, %v1096
          %v1114 = vmul.f32 %v1038, %v1101
          %v1115 = vmul.f32 %v1041, %v1106
          %v1116 = vpack.c.bf16 %v1109, %v1108
          %v1117 = vpack.c.bf16 %v1111, %v1110
          %v1118 = vpack.c.bf16 %v1113, %v1112
          %v1119 = vpack.c.bf16 %v1115, %v1114
          %v1136 = vunpack.c.l.b16 %v389
          %v1137 = vunpack.c.l.b16 %v390
          %v1138 = vunpack.c.l.b16 %v391
          %v1139 = vunpack.c.l.b16 %v392
          %v1140 = vunpack.c.l.b16 %v393
          %v1141 = vunpack.c.l.b16 %v394
          %v1142 = vunpack.c.l.b16 %v395
          %v1143 = vunpack.c.l.b16 %v396
          %v1144 = vunpack.c.l.b16 %v397
          %v1145 = vunpack.c.l.b16 %v398
          %v1146 = vunpack.c.l.b16 %v399
          %v1147 = vunpack.c.l.b16 %v400
          %v1148 = vunpack.c.l.b16 %v401
          %v1149 = vunpack.c.l.b16 %v402
          %v1150 = vunpack.c.l.b16 %v403
          %v1151 = vunpack.c.l.b16 %v404
          %v1152 = vpack.c.b16 %v1137, %v1136
          %v1153 = vpack.c.b16 %v1139, %v1138
          %v1154 = vpack.c.b16 %v1141, %v1140
          %v1155 = vpack.c.b16 %v1143, %v1142
          %v1156 = vpack.c.b16 %v1145, %v1144
          %v1157 = vpack.c.b16 %v1147, %v1146
          %v1158 = vpack.c.b16 %v1149, %v1148
          %v1159 = vpack.c.b16 %v1151, %v1150
          %1168 = vmatprep.subr.bf16.mxu0 0
          %1169 = vmatpush1.bf16.msra.mxu0 %v1152
          %1170 = vmatprep.subr.bf16.mxu0 0
          %1171 = vmatpush1.bf16.msra.mxu0 %v1153
          %1172 = vmatprep.subr.bf16.mxu0 0
          %1173 = vmatpush1.bf16.msra.mxu0 %v1154
          %1174 = vmatprep.subr.bf16.mxu0 0
          %1175 = vmatpush1.bf16.msra.mxu0 %v1155
          %1176 = vmatprep.subr.bf16.mxu0 0
          %1177 = vmatpush1.bf16.msra.mxu0 %v1156
          %1178 = vmatprep.subr.bf16.mxu0 0
          %1179 = vmatpush1.bf16.msra.mxu0 %v1157
          %1180 = vmatprep.subr.bf16.mxu0 0
          %1181 = vmatpush1.bf16.msra.mxu0 %v1158
          %1182 = vmatprep.subr.bf16.mxu0 0
          %1183 = vmatpush1.bf16.msra.mxu0 %v1159
          %1184 = vmatprep.subr.bf16.mxu0 0
          %1185 = vmatpush1.bf16.msra.mxu0 0
          %1186 = vmatprep.subr.bf16.mxu0 0
          %1187 = vmatpush1.bf16.msra.mxu0 0
          %1188 = vmatprep.subr.bf16.mxu0 0
          %1189 = vmatpush1.bf16.msra.mxu0 0
          %1190 = vmatprep.subr.bf16.mxu0 0
          %1191 = vmatpush1.bf16.msra.mxu0 0
          %1192 = vmatprep.subr.bf16.mxu0 0
          %1193 = vmatpush1.bf16.msra.mxu0 0
          %1194 = vmatprep.subr.bf16.mxu0 0
          %1195 = vmatpush1.bf16.msra.mxu0 0
          %1196 = vmatprep.subr.bf16.mxu0 0
          %1197 = vmatpush1.bf16.msra.mxu0 0
          %1198 = vmatprep.subr.bf16.mxu0 0
          %1199 = vmatpush1.bf16.msra.mxu0 0
          %1200 = vmatprep.mubr.bf16.mxu0 0
          %1201 = vmatmul.mubr.bf16.gmra.mrb[0].mxu0 %v1116
          %v1202 = vpop.f32.mrb[0].mxu0
          %v1203 = vadd.f32 0.0, %v1202
          %v1204 = vpop.f32.mrb[0].mxu0
          %v1205 = vpop.f32.mrb[0].mxu0
          %v1206 = vadd.f32 0.0, %v1205
          %v1207 = vpop.f32.mrb[0].mxu0
          %1208 = vmatprep.mubr.bf16.mxu0 0
          %1209 = vmatmul.mubr.bf16.gmra.mrb[0].mxu0 %v1117
          %v1210 = vpop.f32.mrb[0].mxu0
          %v1211 = vadd.f32 0.0, %v1210
          %v1212 = vpop.f32.mrb[0].mxu0
          %v1213 = vpop.f32.mrb[0].mxu0
          %v1214 = vadd.f32 0.0, %v1213
          %v1215 = vpop.f32.mrb[0].mxu0
          %1216 = vmatprep.mubr.bf16.mxu0 0
          %1217 = vmatmul.mubr.bf16.gmra.mrb[0].mxu0 %v1118
          %v1218 = vpop.f32.mrb[0].mxu0
          %v1219 = vadd.f32 0.0, %v1218
          %v1220 = vpop.f32.mrb[0].mxu0
          %v1221 = vpop.f32.mrb[0].mxu0
          %v1222 = vadd.f32 0.0, %v1221
          %v1223 = vpop.f32.mrb[0].mxu0
          %1224 = vmatprep.mubr.bf16.mxu0 0
          %1225 = vmatmul.mubr.bf16.gmra.mrb[0].mxu0 %v1119
          %v1226 = vpop.f32.mrb[0].mxu0
          %v1227 = vadd.f32 0.0, %v1226
          %v1228 = vpop.f32.mrb[0].mxu0
          %v1229 = vpop.f32.mrb[0].mxu0
          %v1230 = vadd.f32 0.0, %v1229
          %v1231 = vpop.f32.mrb[0].mxu0
          %1232 = vdwg.mxu0
          %v1249 = vunpack.c.l.b16 %v373
          %v1250 = vunpack.c.l.b16 %v374
          %v1251 = vunpack.c.l.b16 %v375
          %v1252 = vunpack.c.l.b16 %v376
          %v1253 = vunpack.c.l.b16 %v377
          %v1254 = vunpack.c.l.b16 %v378
          %v1255 = vunpack.c.l.b16 %v379
          %v1256 = vunpack.c.l.b16 %v380
          %v1257 = vunpack.c.l.b16 %v381
          %v1258 = vunpack.c.l.b16 %v382
          %v1259 = vunpack.c.l.b16 %v383
          %v1260 = vunpack.c.l.b16 %v384
          %v1261 = vunpack.c.l.b16 %v385
          %v1262 = vunpack.c.l.b16 %v386
          %v1263 = vunpack.c.l.b16 %v387
          %v1264 = vunpack.c.l.b16 %v388
          %v1265 = vpack.c.b16 %v1250, %v1249
          %v1266 = vpack.c.b16 %v1252, %v1251
          %v1267 = vpack.c.b16 %v1254, %v1253
          %v1268 = vpack.c.b16 %v1256, %v1255
          %v1269 = vpack.c.b16 %v1258, %v1257
          %v1270 = vpack.c.b16 %v1260, %v1259
          %v1271 = vpack.c.b16 %v1262, %v1261
          %v1272 = vpack.c.b16 %v1264, %v1263
          %1281 = vmatprep.subr.bf16.mxu0 0
          %1282 = vmatpush1.bf16.msra.mxu0 %v1265
          %1283 = vmatprep.subr.bf16.mxu0 0
          %1284 = vmatpush1.bf16.msra.mxu0 %v1266
          %1285 = vmatprep.subr.bf16.mxu0 0
          %1286 = vmatpush1.bf16.msra.mxu0 %v1267
          %1287 = vmatprep.subr.bf16.mxu0 0
          %1288 = vmatpush1.bf16.msra.mxu0 %v1268
          %1289 = vmatprep.subr.bf16.mxu0 0
          %1290 = vmatpush1.bf16.msra.mxu0 %v1269
          %1291 = vmatprep.subr.bf16.mxu0 0
          %1292 = vmatpush1.bf16.msra.mxu0 %v1270
          %1293 = vmatprep.subr.bf16.mxu0 0
          %1294 = vmatpush1.bf16.msra.mxu0 %v1271
          %1295 = vmatprep.subr.bf16.mxu0 0
          %1296 = vmatpush1.bf16.msra.mxu0 %v1272
          %1297 = vmatprep.subr.bf16.mxu0 0
          %1298 = vmatpush1.bf16.msra.mxu0 0
          %1299 = vmatprep.subr.bf16.mxu0 0
          %1300 = vmatpush1.bf16.msra.mxu0 0
          %1301 = vmatprep.subr.bf16.mxu0 0
          %1302 = vmatpush1.bf16.msra.mxu0 0
          %1303 = vmatprep.subr.bf16.mxu0 0
          %1304 = vmatpush1.bf16.msra.mxu0 0
          %1305 = vmatprep.subr.bf16.mxu0 0
          %1306 = vmatpush1.bf16.msra.mxu0 0
          %1307 = vmatprep.subr.bf16.mxu0 0
          %1308 = vmatpush1.bf16.msra.mxu0 0
          %1309 = vmatprep.subr.bf16.mxu0 0
          %1310 = vmatpush1.bf16.msra.mxu0 0
          %1311 = vmatprep.subr.bf16.mxu0 0
          %1312 = vmatpush1.bf16.msra.mxu0 0
          %1313 = vmatprep.mubr.bf16.mxu0 0
          %1314 = vmatmul.mubr.bf16.gmra.mrb[0].mxu0 %v951
          %v1315 = vpop.f32.mrb[0].mxu0
          %v1316 = vadd.f32 %v1203, %v1315
          %v1317 = vpop.f32.mrb[0].mxu0
          %v1318 = vpop.f32.mrb[0].mxu0
          %v1319 = vadd.f32 %v1206, %v1318
          %v1320 = vpop.f32.mrb[0].mxu0
          %1321 = vmatprep.mubr.bf16.mxu0 0
          %1322 = vmatmul.mubr.bf16.gmra.mrb[0].mxu0 %v952
          %v1323 = vpop.f32.mrb[0].mxu0
          %v1324 = vadd.f32 %v1211, %v1323
          %v1325 = vpop.f32.mrb[0].mxu0
          %v1326 = vpop.f32.mrb[0].mxu0
          %v1327 = vadd.f32 %v1214, %v1326
          %v1328 = vpop.f32.mrb[0].mxu0
          %1329 = vmatprep.mubr.bf16.mxu0 0
          %1330 = vmatmul.mubr.bf16.gmra.mrb[0].mxu0 %v953
          %v1331 = vpop.f32.mrb[0].mxu0
          %v1332 = vadd.f32 %v1219, %v1331
          %v1333 = vpop.f32.mrb[0].mxu0
          %v1334 = vpop.f32.mrb[0].mxu0
          %v1335 = vadd.f32 %v1222, %v1334
          %v1336 = vpop.f32.mrb[0].mxu0
          %1337 = vmatprep.mubr.bf16.mxu0 0
          %1338 = vmatmul.mubr.bf16.gmra.mrb[0].mxu0 %v954
          %v1339 = vpop.f32.mrb[0].mxu0
          %v1340 = vadd.f32 %v1227, %v1339
          %v1341 = vpop.f32.mrb[0].mxu0
          %v1342 = vpop.f32.mrb[0].mxu0
          %v1343 = vadd.f32 %v1230, %v1342
          %v1344 = vpop.f32.mrb[0].mxu0
          %1345 = vdwg.mxu0
          %v1347 = vlaneseq
          %v1348 = vshrl.u32 %v1347, 7
          %v1349 = vsub.s32 0, %v1348
          %v1350 = vrot.slane %v405, %v1349
          %v1352 = vadd.f32 %v1316, %v1350
          %v1353 = vadd.f32 %v1319, %v1350
          %v1354 = vadd.f32 %v1324, %v1350
          %v1355 = vadd.f32 %v1327, %v1350
          %v1356 = vadd.f32 %v1332, %v1350
          %v1357 = vadd.f32 %v1335, %v1350
          %v1358 = vadd.f32 %v1340, %v1350
          %v1359 = vadd.f32 %v1343, %v1350
          %1360 = vst [vmem:[%s356] sm:$0xff] %v1352
          %1361 = vst [vmem:[%s356 + $0x8] sm:$0xff] %v1353
          %1362 = vst [vmem:[%s356 + $0x10] sm:$0xff] %v1354
          %1363 = vst [vmem:[%s356 + $0x18] sm:$0xff] %v1355
          %1364 = vst [vmem:[%s356 + $0x20] sm:$0xff] %v1356
          %1365 = vst [vmem:[%s356 + $0x28] sm:$0xff] %v1357
          %1366 = vst [vmem:[%s356 + $0x30] sm:$0xff] %v1358
          %1367 = vst [vmem:[%s356 + $0x38] sm:$0xff] %v1359
        $region64: #{tpu_custom_call.1} parent=39 // pred_fallthru
          _
        %s1368 = sand.u32 %s170, 1
        %s1369 = scalar_lea.sflag [#allocation5], %s1368
        %s1370 = sand.u32 %s170, 1
        %s1371 = smul.addr %s1370, 64
        %s1372 = scalar_lea.vmem [#allocation10], %s1371
        // Predicated region
        $region65: #{tpu_custom_call.1} parent=39 // pred_check
          %p1373 = pneg %p180
        $region66: #{tpu_custom_call.1} parent=39 // pred_check_branch
          %1375 = sbr.rel (%p1373) target = $region68
        $region67: #{tpu_custom_call.1} parent=39 // pred_region
          %s1376 = smul.u32 %s27, %s28
          %s1377 = smul.u32 8, %s1376
          %s1379 = ssub.s32 1024, 1024
          %1380 = vsyncadd %s1369, %s1379
          %s1381 = smul.addr %s1377, 128
          %s1382 = scalar_lea.hbm %s5, %s1381
          %s1383 = sshll.u32 %s1372, 4
          %s1384 = int_to_ptr.vmem [resolvable:$true] %s1383
          %1389 = dma.vmem_to_hbm [thread:$0]  %s1384, 1024, %s1382, %s1369, 128, 128, 8
        $region68: #{tpu_custom_call.1} parent=39 // pred_fallthru
          _
      $region40: #{tpu_custom_call.1} parent=5 // pred_fallthru
        _
      %p1390 = scmp.le.s32.totalorder 2, %s18
      // Predicated region
      $region69: #{tpu_custom_call.1} parent=5 // pred_check
        %p1391 = pneg %p1390
      $region70: #{tpu_custom_call.1} parent=5 // pred_check_branch
        %1393 = sbr.rel (%p1391) target = $region72
      $region71: #{tpu_custom_call.1} parent=5 // pred_region
        %s1394 = ssub.s32 %s18, 2
        // Predicated region
        $region73: #{tpu_custom_call.1} parent=71 // pred_check
          %p1395 = pneg %p186
        $region74: #{tpu_custom_call.1} parent=71 // pred_check_branch
          %1397 = sbr.rel (%p1395) target = $region76
        $region75: #{tpu_custom_call.1} parent=71 // pred_region
          %s1398 = sand.u32 %s171, 1
          %s1399 = scalar_lea.sflag [#allocation5], %s1398
          %s1400 = sand.u32 %s171, 1
          %s1401 = smul.addr %s1400, 64
          %s1402 = scalar_lea.vmem [#allocation10], %s1401
          %1403 = dma.done %s1399, 1024
        $region76: #{tpu_custom_call.1} parent=71 // pred_fallthru
          _
      $region72: #{tpu_custom_call.1} parent=5 // pred_fallthru
        _
    $region6: #{tpu_custom_call.1} parent=1 // loop_footer
      %s22 = sadd.s32 1, %s18
    $region7: #{tpu_custom_call.1} parent=1 // loop_footer_branch
      %17 = sbr.rel target = $region3
    $region8: #{tpu_custom_call.1} parent=1 // loop_exit
      _
    %1404 = vsyncpa [#allocation4], 1
    %s1405 = scalar_lea.sflag [#allocation4], 1
    %1406 = vsyncpa %s1405, 1
    %1407 = vsyncpa [#allocation7], 1
    %1408 = vsyncpa [#allocation5], 1
    %s1409 = scalar_lea.sflag [#allocation5], 1
    %1410 = vsyncpa %s1409, 1

</llo_original>
